<compile_context>
chip_gen: v5e
topology: v5e:2x2
jax: 0.10.0
libtpu: 0.0.40
codegen_flags: <defaults>
</compile_context>

<pallas_src>
import functools

import jax
import jax.numpy as jnp
from jax.experimental import pallas as pl
from jax.experimental.pallas import tpu as pltpu


def _mlp_kernel(x_ref, w1_ref, b1_ref, w2_ref, b2_ref, w3_ref, b3_ref,
                w4t_ref, b4_ref, *rest, keep_threshold, inv_keep, use_dropout):
    """One batch tile of the full MLP forward, entirely in VMEM.

    x_ref   : (TB, 1) f32
    w1_ref  : (1, N)  f32   b1_ref : (1, N) f32
    w2_ref  : (N, N)  f32   b2_ref : (1, N) f32
    w3_ref  : (N, N)  f32   b3_ref : (1, N) f32
    w4t_ref : (1, N)  f32   b4_ref : (1, 1) f32     (W4 stored transposed)
    rest    : [m1, m2, m3,] o_ref   with mK : (TB, N) uint32 dropout bits
    """
    if use_dropout:
        m1_ref, m2_ref, m3_ref, o_ref = rest
    else:
        m1_ref = m2_ref = m3_ref = None
        (o_ref,) = rest

    thresh = jnp.uint32(keep_threshold)

    def dropout(h, bits_ref):
        if not use_dropout:
            return h
        keep = bits_ref[...] < thresh                 # P(keep) = 1 - d_prob
        return jnp.where(keep, h * inv_keep, 0.0)     # inverted dropout

    # Layer 1: in_features == 1  ->  rank-1 update on the VPU (no MXU).
    h = jnp.maximum(x_ref[...] * w1_ref[...] + b1_ref[...], 0.0)   # (TB,1)*(1,N)
    h = dropout(h, m1_ref)

    # Layers 2 & 3: N x N matmuls on the MXU with f32 accumulation.
    h = jnp.maximum(
        jnp.dot(h, w2_ref[...], preferred_element_type=jnp.float32) + b2_ref[...],
        0.0)
    h = dropout(h, m2_ref)
    h = jnp.maximum(
        jnp.dot(h, w3_ref[...], preferred_element_type=jnp.float32) + b3_ref[...],
        0.0)
    h = dropout(h, m3_ref)

    # Layer 4: out_features == 1 -> VPU multiply + XLU lane reduce (no MXU).
    o_ref[...] = jnp.sum(h * w4t_ref[...], axis=-1, keepdims=True) + b4_ref[...]


def mlp_forward(x, params, *, d_prob=0.5, train=True, dropout_key=None,
                block_batch=128):
    """x: (B, 1) float32. params: [(W, b)]*4 with W (in,out), b (1,out)."""
    B = x.shape[0]
    (w1, b1), (w2, b2), (w3, b3), (w4, b4) = params
    N = w1.shape[1]
    w4t = w4.reshape(1, N)                       # (N,1) -> (1,N) for lane reduce

    use_dropout = bool(train) and float(d_prob) > 0.0
    keep = 1.0 - float(d_prob)
    inv_keep = (1.0 / keep) if keep > 0.0 else 0.0
    keep_threshold = min(int(keep * (1 << 32)), (1 << 32) - 1)

    # Batch tile: large multiple of 8 so the MXU M-dimension is filled and the
    # x / o / mask DMAs pipeline; fall back to whole-array if B is not divisible.
    TB = block_batch if (B % block_batch == 0) else B
    grid = (B // TB,)

    def row_spec(feat):
        return pl.BlockSpec((TB, feat), lambda i: (i, 0))

    def const_spec(shape):
        return pl.BlockSpec(shape, lambda i: (0, 0))   # VMEM-resident across grid

    inputs = [x, w1, b1, w2, b2, w3, b3, w4t, b4]
    in_specs = [
        row_spec(1),
        const_spec(w1.shape), const_spec(b1.shape),
        const_spec(w2.shape), const_spec(b2.shape),
        const_spec(w3.shape), const_spec(b3.shape),
        const_spec(w4t.shape), const_spec(b4.shape),
    ]

    if use_dropout:
        if dropout_key is None:
            dropout_key = jax.random.PRNGKey(0)
        # Per-layer, per-element random bits (independent across rows, so every
        # batch tile gets its own mask).  Vary dropout_key per training step.
        for k in jax.random.split(dropout_key, 3):
            inputs.append(jax.random.bits(k, (B, N), dtype=jnp.uint32))
            in_specs.append(row_spec(N))

    kernel = functools.partial(
        _mlp_kernel,
        keep_threshold=keep_threshold,
        inv_keep=inv_keep,
        use_dropout=use_dropout,
    )

    return pl.pallas_call(
        kernel,
        out_shape=jax.ShapeDtypeStruct((B, 1), jnp.float32),
        grid=grid,
        in_specs=in_specs,
        out_specs=row_spec(1),
        compiler_params=pltpu.CompilerParams(
            dimension_semantics=("parallel",)),
    )(*inputs)


def init_params(key, neural_num):
    """Deterministic init matching nn.Linear's U(-1/sqrt(fan_in), 1/sqrt(fan_in))."""
    dims = [(1, neural_num), (neural_num, neural_num),
            (neural_num, neural_num), (neural_num, 1)]
    params = []
    for (fan_in, fan_out) in dims:
        key, kw, kb = jax.random.split(key, 3)
        bound = 1.0 / (fan_in ** 0.5)
        w = jax.random.uniform(kw, (fan_in, fan_out), jnp.float32, -bound, bound)
        b = jax.random.uniform(kb, (1, fan_out), jnp.float32, -bound, bound)
        params.append((w, b))
    return params


if __name__ == "__main__":
    key = jax.random.PRNGKey(0)
    key, kx, kdrop = jax.random.split(key, 3)

    neural_num = 32
    batch = 256                     # 2 grid steps of 128-row tiles
    x = jax.random.normal(kx, (batch, 1), jnp.float32)

    params = init_params(key, neural_num)

    # training-mode forward (dropout active, deterministic via dropout_key)
    out_train = mlp_forward(x, params, d_prob=0.5, train=True, dropout_key=kdrop)
    # eval-mode forward (dropout is identity)
    out_eval = mlp_forward(x, params, d_prob=0.5, train=False)

    jax.block_until_ready(out_train)
    jax.block_until_ready(out_eval)

    assert out_train.shape == (batch, 1) and out_eval.shape == (batch, 1)
    assert bool(jnp.all(jnp.isfinite(out_train))) and bool(jnp.all(jnp.isfinite(out_eval)))
    print("KERNEL_OK")
</pallas_src>

<mosaic_0001>
module attributes {stable_mosaic.version = 11 : i64} {
  func.func @_mlp_kernel(%arg0: i32, %arg1: memref<128x1xf32, #tpu.memory_space<vmem>>, %arg2: memref<1x32xf32, #tpu.memory_space<vmem>>, %arg3: memref<1x32xf32, #tpu.memory_space<vmem>>, %arg4: memref<32x32xf32, #tpu.memory_space<vmem>>, %arg5: memref<1x32xf32, #tpu.memory_space<vmem>>, %arg6: memref<32x32xf32, #tpu.memory_space<vmem>>, %arg7: memref<1x32xf32, #tpu.memory_space<vmem>>, %arg8: memref<1x32xf32, #tpu.memory_space<vmem>>, %arg9: memref<1x1xf32, #tpu.memory_space<vmem>>, %arg10: memref<128x32xi32, #tpu.memory_space<vmem>>, %arg11: memref<128x32xi32, #tpu.memory_space<vmem>>, %arg12: memref<128x32xi32, #tpu.memory_space<vmem>>, %arg13: memref<128x1xf32, #tpu.memory_space<vmem>>) attributes {dimension_semantics = [#tpu.dimension_semantics<parallel>], iteration_bounds = array<i64: 2>, scalar_prefetch = 0 : i64, scratch_operands = 0 : i64, tpu.core_type = #tpu.core_type<tc>, window_params = [{transform_indices = @transform_0, window_bounds = array<i64: 128, 1>}, {pipeline_mode = #tpu.pipeline_mode<synchronous>, transform_indices = @transform_1, window_bounds = array<i64: 1, 32>}, {pipeline_mode = #tpu.pipeline_mode<synchronous>, transform_indices = @transform_2, window_bounds = array<i64: 1, 32>}, {pipeline_mode = #tpu.pipeline_mode<synchronous>, transform_indices = @transform_3, window_bounds = array<i64: 32, 32>}, {pipeline_mode = #tpu.pipeline_mode<synchronous>, transform_indices = @transform_4, window_bounds = array<i64: 1, 32>}, {pipeline_mode = #tpu.pipeline_mode<synchronous>, transform_indices = @transform_5, window_bounds = array<i64: 32, 32>}, {pipeline_mode = #tpu.pipeline_mode<synchronous>, transform_indices = @transform_6, window_bounds = array<i64: 1, 32>}, {pipeline_mode = #tpu.pipeline_mode<synchronous>, transform_indices = @transform_7, window_bounds = array<i64: 1, 32>}, {pipeline_mode = #tpu.pipeline_mode<synchronous>, transform_indices = @transform_8, window_bounds = array<i64: 1, 1>}, {transform_indices = @transform_9, window_bounds = array<i64: 128, 32>}, {transform_indices = @transform_10, window_bounds = array<i64: 128, 32>}, {transform_indices = @transform_11, window_bounds = array<i64: 128, 32>}, {transform_indices = @transform_12, window_bounds = array<i64: 128, 1>}]} {
    %c0 = arith.constant 0 : index
    %c0_0 = arith.constant 0 : index
    %0 = vector.load %arg1[%c0, %c0_0] : memref<128x1xf32, #tpu.memory_space<vmem>>, vector<128x1xf32>
    %c0_1 = arith.constant 0 : index
    %c0_2 = arith.constant 0 : index
    %1 = vector.load %arg2[%c0_1, %c0_2] : memref<1x32xf32, #tpu.memory_space<vmem>>, vector<1x32xf32>
    %2 = vector.broadcast %0 : vector<128x1xf32> to vector<128x32xf32>
    %3 = vector.broadcast %1 : vector<1x32xf32> to vector<128x32xf32>
    %4 = arith.mulf %2, %3 : vector<128x32xf32>
    %c0_3 = arith.constant 0 : index
    %c0_4 = arith.constant 0 : index
    %5 = vector.load %arg3[%c0_3, %c0_4] : memref<1x32xf32, #tpu.memory_space<vmem>>, vector<1x32xf32>
    %6 = vector.broadcast %5 : vector<1x32xf32> to vector<128x32xf32>
    %7 = arith.addf %4, %6 : vector<128x32xf32>
    %cst = arith.constant 0.000000e+00 : f32
    %8 = vector.broadcast %cst : f32 to vector<128x32xf32>
    %9 = arith.maximumf %7, %8 : vector<128x32xf32>
    %c0_5 = arith.constant 0 : index
    %c0_6 = arith.constant 0 : index
    %10 = vector.load %arg10[%c0_5, %c0_6] : memref<128x32xi32, #tpu.memory_space<vmem>>, vector<128x32xi32>
    %c-2147483648_i32 = arith.constant -2147483648 : i32
    %11 = vector.broadcast %c-2147483648_i32 : i32 to vector<128x32xi32>
    %12 = arith.cmpi ult, %10, %11 : vector<128x32xi32>
    %cst_7 = arith.constant 2.000000e+00 : f32
    %13 = vector.broadcast %cst_7 : f32 to vector<128x32xf32>
    %14 = arith.mulf %9, %13 : vector<128x32xf32>
    %cst_8 = arith.constant 0.000000e+00 : f32
    %15 = vector.broadcast %cst_8 : f32 to vector<128x32xf32>
    %16 = arith.select %12, %14, %15 : vector<128x32xi1>, vector<128x32xf32>
    %c0_9 = arith.constant 0 : index
    %c0_10 = arith.constant 0 : index
    %17 = vector.load %arg4[%c0_9, %c0_10] : memref<32x32xf32, #tpu.memory_space<vmem>>, vector<32x32xf32>
    %cst_11 = arith.constant dense<0.000000e+00> : vector<128x32xf32>
    %18 = tpu.matmul %16, %17, %cst_11 {dimension_numbers = #tpu.dot_dimension_numbers<[1], [0], [0], [1], [0, 0, 1, 1], [], []>} : vector<128x32xf32>, vector<32x32xf32>, vector<128x32xf32> -> vector<128x32xf32>
    %c0_12 = arith.constant 0 : index
    %c0_13 = arith.constant 0 : index
    %19 = vector.load %arg5[%c0_12, %c0_13] : memref<1x32xf32, #tpu.memory_space<vmem>>, vector<1x32xf32>
    %20 = vector.broadcast %19 : vector<1x32xf32> to vector<128x32xf32>
    %21 = arith.addf %18, %20 : vector<128x32xf32>
    %cst_14 = arith.constant 0.000000e+00 : f32
    %22 = vector.broadcast %cst_14 : f32 to vector<128x32xf32>
    %23 = arith.maximumf %21, %22 : vector<128x32xf32>
    %c0_15 = arith.constant 0 : index
    %c0_16 = arith.constant 0 : index
    %24 = vector.load %arg11[%c0_15, %c0_16] : memref<128x32xi32, #tpu.memory_space<vmem>>, vector<128x32xi32>
    %c-2147483648_i32_17 = arith.constant -2147483648 : i32
    %25 = vector.broadcast %c-2147483648_i32_17 : i32 to vector<128x32xi32>
    %26 = arith.cmpi ult, %24, %25 : vector<128x32xi32>
    %cst_18 = arith.constant 2.000000e+00 : f32
    %27 = vector.broadcast %cst_18 : f32 to vector<128x32xf32>
    %28 = arith.mulf %23, %27 : vector<128x32xf32>
    %cst_19 = arith.constant 0.000000e+00 : f32
    %29 = vector.broadcast %cst_19 : f32 to vector<128x32xf32>
    %30 = arith.select %26, %28, %29 : vector<128x32xi1>, vector<128x32xf32>
    %c0_20 = arith.constant 0 : index
    %c0_21 = arith.constant 0 : index
    %31 = vector.load %arg6[%c0_20, %c0_21] : memref<32x32xf32, #tpu.memory_space<vmem>>, vector<32x32xf32>
    %cst_22 = arith.constant dense<0.000000e+00> : vector<128x32xf32>
    %32 = tpu.matmul %30, %31, %cst_22 {dimension_numbers = #tpu.dot_dimension_numbers<[1], [0], [0], [1], [0, 0, 1, 1], [], []>} : vector<128x32xf32>, vector<32x32xf32>, vector<128x32xf32> -> vector<128x32xf32>
    %c0_23 = arith.constant 0 : index
    %c0_24 = arith.constant 0 : index
    %33 = vector.load %arg7[%c0_23, %c0_24] : memref<1x32xf32, #tpu.memory_space<vmem>>, vector<1x32xf32>
    %34 = vector.broadcast %33 : vector<1x32xf32> to vector<128x32xf32>
    %35 = arith.addf %32, %34 : vector<128x32xf32>
    %cst_25 = arith.constant 0.000000e+00 : f32
    %36 = vector.broadcast %cst_25 : f32 to vector<128x32xf32>
    %37 = arith.maximumf %35, %36 : vector<128x32xf32>
    %c0_26 = arith.constant 0 : index
    %c0_27 = arith.constant 0 : index
    %38 = vector.load %arg12[%c0_26, %c0_27] : memref<128x32xi32, #tpu.memory_space<vmem>>, vector<128x32xi32>
    %c-2147483648_i32_28 = arith.constant -2147483648 : i32
    %39 = vector.broadcast %c-2147483648_i32_28 : i32 to vector<128x32xi32>
    %40 = arith.cmpi ult, %38, %39 : vector<128x32xi32>
    %cst_29 = arith.constant 2.000000e+00 : f32
    %41 = vector.broadcast %cst_29 : f32 to vector<128x32xf32>
    %42 = arith.mulf %37, %41 : vector<128x32xf32>
    %cst_30 = arith.constant 0.000000e+00 : f32
    %43 = vector.broadcast %cst_30 : f32 to vector<128x32xf32>
    %44 = arith.select %40, %42, %43 : vector<128x32xi1>, vector<128x32xf32>
    %c0_31 = arith.constant 0 : index
    %c0_32 = arith.constant 0 : index
    %45 = vector.load %arg8[%c0_31, %c0_32] : memref<1x32xf32, #tpu.memory_space<vmem>>, vector<1x32xf32>
    %46 = vector.broadcast %45 : vector<1x32xf32> to vector<128x32xf32>
    %47 = arith.mulf %44, %46 : vector<128x32xf32>
    %cst_33 = arith.constant dense<0.000000e+00> : vector<128xf32>
    %48 = vector.multi_reduction <add>, %47, %cst_33 [1] : vector<128x32xf32> to vector<128xf32>
    %49 = vector.shape_cast %48 : vector<128xf32> to vector<128x1xf32>
    %c0_34 = arith.constant 0 : index
    %c0_35 = arith.constant 0 : index
    %50 = vector.load %arg9[%c0_34, %c0_35] : memref<1x1xf32, #tpu.memory_space<vmem>>, vector<1x1xf32>
    %51 = vector.broadcast %50 : vector<1x1xf32> to vector<128x1xf32>
    %52 = arith.addf %49, %51 : vector<128x1xf32>
    %c0_36 = arith.constant 0 : index
    %c0_37 = arith.constant 0 : index
    %53 = vector.load %arg13[%c0_36, %c0_37] : memref<128x1xf32, #tpu.memory_space<vmem>>, vector<128x1xf32>
    tpu.vector_store %arg13[%c0_36, %c0_37], %52 {strides = array<i32>} : memref<128x1xf32, #tpu.memory_space<vmem>>, vector<128x1xf32>,
    return
  }
  func.func @transform_0(%arg0: i32) -> (i32, i32) {
    %c0_i32 = arith.constant 0 : i32
    %c0_i32_0 = arith.constant 0 : i32
    return %arg0, %c0_i32 : i32, i32
  }
  func.func @transform_1(%arg0: i32) -> (i32, i32) {
    %c0_i32 = arith.constant 0 : i32
    %c0_i32_0 = arith.constant 0 : i32
    %c0_i32_1 = arith.constant 0 : i32
    return %c0_i32, %c0_i32_0 : i32, i32
  }
  func.func @transform_2(%arg0: i32) -> (i32, i32) {
    %c0_i32 = arith.constant 0 : i32
    %c0_i32_0 = arith.constant 0 : i32
    %c0_i32_1 = arith.constant 0 : i32
    return %c0_i32, %c0_i32_0 : i32, i32
  }
  func.func @transform_3(%arg0: i32) -> (i32, i32) {
    %c0_i32 = arith.constant 0 : i32
    %c0_i32_0 = arith.constant 0 : i32
    %c0_i32_1 = arith.constant 0 : i32
    return %c0_i32, %c0_i32_0 : i32, i32
  }
  func.func @transform_4(%arg0: i32) -> (i32, i32) {
    %c0_i32 = arith.constant 0 : i32
    %c0_i32_0 = arith.constant 0 : i32
    %c0_i32_1 = arith.constant 0 : i32
    return %c0_i32, %c0_i32_0 : i32, i32
  }
  func.func @transform_5(%arg0: i32) -> (i32, i32) {
    %c0_i32 = arith.constant 0 : i32
    %c0_i32_0 = arith.constant 0 : i32
    %c0_i32_1 = arith.constant 0 : i32
    return %c0_i32, %c0_i32_0 : i32, i32
  }
  func.func @transform_6(%arg0: i32) -> (i32, i32) {
    %c0_i32 = arith.constant 0 : i32
    %c0_i32_0 = arith.constant 0 : i32
    %c0_i32_1 = arith.constant 0 : i32
    return %c0_i32, %c0_i32_0 : i32, i32
  }
  func.func @transform_7(%arg0: i32) -> (i32, i32) {
    %c0_i32 = arith.constant 0 : i32
    %c0_i32_0 = arith.constant 0 : i32
    %c0_i32_1 = arith.constant 0 : i32
    return %c0_i32, %c0_i32_0 : i32, i32
  }
  func.func @transform_8(%arg0: i32) -> (i32, i32) {
    %c0_i32 = arith.constant 0 : i32
    %c0_i32_0 = arith.constant 0 : i32
    %c0_i32_1 = arith.constant 0 : i32
    return %c0_i32, %c0_i32_0 : i32, i32
  }
  func.func @transform_9(%arg0: i32) -> (i32, i32) {
    %c0_i32 = arith.constant 0 : i32
    %c0_i32_0 = arith.constant 0 : i32
    return %arg0, %c0_i32 : i32, i32
  }
  func.func @transform_10(%arg0: i32) -> (i32, i32) {
    %c0_i32 = arith.constant 0 : i32
    %c0_i32_0 = arith.constant 0 : i32
    return %arg0, %c0_i32 : i32, i32
  }
  func.func @transform_11(%arg0: i32) -> (i32, i32) {
    %c0_i32 = arith.constant 0 : i32
    %c0_i32_0 = arith.constant 0 : i32
    return %arg0, %c0_i32 : i32, i32
  }
  func.func @transform_12(%arg0: i32) -> (i32, i32) {
    %c0_i32 = arith.constant 0 : i32
    %c0_i32_0 = arith.constant 0 : i32
    return %arg0, %c0_i32 : i32, i32
  }
}

</mosaic_0001>

<llo_original>
// kernel: tpu_custom_call.1
$region0: #{tpu_custom_call.1}
  #allocation0 [shape = 'u32[]', space=smem, size = 0x4, offset = 0x4, fixed_abs, tag = 'smem constant byte address 0x4 - core index']
  #allocation1 [shape = 'u32[72,128]{1,0:T(1,128)}', space=vmem, size = 0x9000, scoped, tag = 'internal scratch']
  #allocation2 [shape = 'f32[1,1]{1,0:T(1,128)S(1)}', space=vmem, size = 0x200, scoped, tag = 'scoped memory for tpu_custom_call.1']
  %s0 = inlined_call_operand.vmem [shape: f32[256,1], index: 0, kind: input, shape index: {}]
  %s1 = inlined_call_operand.vmem [shape: f32[1,32], index: 1, kind: input, shape index: {}]
  %s2 = inlined_call_operand.vmem [shape: f32[1,32], index: 2, kind: input, shape index: {}]
  %s3 = inlined_call_operand.vmem [shape: f32[32,32], index: 3, kind: input, shape index: {}]
  %s4 = inlined_call_operand.vmem [shape: f32[1,32], index: 4, kind: input, shape index: {}]
  %s5 = inlined_call_operand.vmem [shape: f32[32,32], index: 5, kind: input, shape index: {}]
  %s6 = inlined_call_operand.vmem [shape: f32[1,32], index: 6, kind: input, shape index: {}]
  %s7 = inlined_call_operand.vmem [shape: f32[1,32], index: 7, kind: input, shape index: {}]
  %s8 = inlined_call_operand.<no memory space> [shape: f32[1,1], index: 8, kind: input, shape index: {}]
  %s9 = inlined_call_operand.vmem [shape: u32[256,32], index: 9, kind: input, shape index: {}]
  %s10 = inlined_call_operand.vmem [shape: u32[256,32], index: 10, kind: input, shape index: {}]
  %s11 = inlined_call_operand.vmem [shape: u32[256,32], index: 11, kind: input, shape index: {}]
  %s12 = inlined_call_operand.vmem [shape: f32[256,1], index: 12, kind: output, shape index: {}]
  %s13 = sld [smem:[#allocation0]]
  $region81: #{tpu_custom_call.1} parent=0
    _
  %s15 = ssub.s32 1, %s13
  %s16 = scalar_select 0, %s15, %s13
  %v17 = vstv %s8
  %18 = vst [vmem:[#allocation2] sm:$0x1] %v17
  loop: start=0, step=1, limit=4
  $region2: #{tpu_custom_call.1} parent=0 // loop_pre_header
    _
  $region3: #{tpu_custom_call.1} parent=0 // loop_header
    %s20 = sphi 0, %s24
    %p21 = scmp.ge.s32.totalorder %s20, 4
    %s30 = sphi 0, %s32
    %s33 = sphi 0, %s30
    %s34 = sphi 0, %s33
    %s50 = sphi 0, %s34
    %s54 = sphi 0, %s54
    %s56 = sphi 0, %s54
    %s57 = sphi 0, %s56
    %s71 = sphi 0, %s57
    %s75 = sphi 0, %s75
    %s77 = sphi 0, %s75
    %s78 = sphi 0, %s77
    %s92 = sphi 0, %s78
    %s96 = sphi 0, %s96
    %s98 = sphi 0, %s96
    %s99 = sphi 0, %s98
    %s113 = sphi 0, %s99
    %s117 = sphi 0, %s117
    %s119 = sphi 0, %s117
    %s120 = sphi 0, %s119
    %s134 = sphi 0, %s120
    %s138 = sphi 0, %s138
    %s140 = sphi 0, %s138
    %s141 = sphi 0, %s140
    %s155 = sphi 0, %s141
    %s159 = sphi 0, %s159
    %s161 = sphi 0, %s159
    %s162 = sphi 0, %s161
    %s176 = sphi 0, %s162
    %s180 = sphi 0, %s180
    %s182 = sphi 0, %s180
    %s183 = sphi 0, %s182
    %s197 = sphi 0, %s183
    %s201 = sphi 0, %s201
    %s203 = sphi 0, %s201
    %s204 = sphi 0, %s203
    %s218 = sphi 0, %s204
    %s224 = sphi 0, %s226
    %s227 = sphi 0, %s224
    %s228 = sphi 0, %s227
    %s244 = sphi 0, %s228
    %s250 = sphi 0, %s252
    %s253 = sphi 0, %s250
    %s254 = sphi 0, %s253
    %s270 = sphi 0, %s254
    %s276 = sphi 0, %s278
    %s279 = sphi 0, %s276
    %s280 = sphi 0, %s279
    %s296 = sphi 0, %s280
    %s302 = sphi 0, %s304
    %s305 = sphi 0, %s302
    %s306 = sphi 0, %s305
    %s322 = sphi 0, %s306
  $region4: #{tpu_custom_call.1} parent=0 // loop_header_branch
    %23 = sbr.rel (%p21) target = $region8
  $region5: #{tpu_custom_call.1} parent=0 // loop_body
    %s25 = ssub.s32 %s20, 1
    %s26 = ssub.s32 %s20, 2
    %s27 = sadd.s32 %s20, 1
    %s28 = ssub.s32 %s20, %s27
    %p29 = scmp.eq.s32.totalorder %s28, 0
    %s31 = sadd.s32 %s30, 1
    %s32 = scalar_select %p29, %s30, %s31
    %p35 = pneg %p29
    %p36 = scmp.eq.s32.totalorder %s20, 1
    %p37 = por %p35, %p36
    %p38 = scmp.ne.s32.totalorder %s30, %s33
    %p39 = scmp.eq.s32.totalorder %s20, 0
    %p40 = por %p38, %p39
    %p41 = scmp.ne.s32.totalorder %s30, %s33
    %p42 = scmp.eq.s32.totalorder %s25, 1
    %p43 = por %p41, %p42
    %p44 = scmp.ne.s32.totalorder %s33, %s34
    %p45 = scmp.eq.s32.totalorder %s25, 0
    %p46 = por %p44, %p45
    %p47 = scmp.ne.s32.totalorder %s33, %s34
    %p48 = scmp.eq.s32.totalorder %s26, 1
    %p49 = por %p47, %p48
    %p51 = scmp.ne.s32.totalorder %s34, %s50
    %p52 = scmp.eq.s32.totalorder %s26, 0
    %p53 = por %p51, %p52
    %s55 = sadd.s32 %s54, 1
    %p58 = scmp.eq.s32.totalorder %s20, 1
    %p59 = scmp.ne.s32.totalorder %s54, %s56
    %p60 = scmp.eq.s32.totalorder %s20, 0
    %p61 = por %p59, %p60
    %p62 = scmp.ne.s32.totalorder %s54, %s56
    %p63 = scmp.eq.s32.totalorder %s25, 1
    %p64 = por %p62, %p63
    %p65 = scmp.ne.s32.totalorder %s56, %s57
    %p66 = scmp.eq.s32.totalorder %s25, 0
    %p67 = por %p65, %p66
    %p68 = scmp.ne.s32.totalorder %s56, %s57
    %p69 = scmp.eq.s32.totalorder %s26, 1
    %p70 = por %p68, %p69
    %p72 = scmp.ne.s32.totalorder %s57, %s71
    %p73 = scmp.eq.s32.totalorder %s26, 0
    %p74 = por %p72, %p73
    %s76 = sadd.s32 %s75, 1
    %p79 = scmp.eq.s32.totalorder %s20, 1
    %p80 = scmp.ne.s32.totalorder %s75, %s77
    %p81 = scmp.eq.s32.totalorder %s20, 0
    %p82 = por %p80, %p81
    %p83 = scmp.ne.s32.totalorder %s75, %s77
    %p84 = scmp.eq.s32.totalorder %s25, 1
    %p85 = por %p83, %p84
    %p86 = scmp.ne.s32.totalorder %s77, %s78
    %p87 = scmp.eq.s32.totalorder %s25, 0
    %p88 = por %p86, %p87
    %p89 = scmp.ne.s32.totalorder %s77, %s78
    %p90 = scmp.eq.s32.totalorder %s26, 1
    %p91 = por %p89, %p90
    %p93 = scmp.ne.s32.totalorder %s78, %s92
    %p94 = scmp.eq.s32.totalorder %s26, 0
    %p95 = por %p93, %p94
    %s97 = sadd.s32 %s96, 1
    %p100 = scmp.eq.s32.totalorder %s20, 1
    %p101 = scmp.ne.s32.totalorder %s96, %s98
    %p102 = scmp.eq.s32.totalorder %s20, 0
    %p103 = por %p101, %p102
    %p104 = scmp.ne.s32.totalorder %s96, %s98
    %p105 = scmp.eq.s32.totalorder %s25, 1
    %p106 = por %p104, %p105
    %p107 = scmp.ne.s32.totalorder %s98, %s99
    %p108 = scmp.eq.s32.totalorder %s25, 0
    %p109 = por %p107, %p108
    %p110 = scmp.ne.s32.totalorder %s98, %s99
    %p111 = scmp.eq.s32.totalorder %s26, 1
    %p112 = por %p110, %p111
    %p114 = scmp.ne.s32.totalorder %s99, %s113
    %p115 = scmp.eq.s32.totalorder %s26, 0
    %p116 = por %p114, %p115
    %s118 = sadd.s32 %s117, 1
    %p121 = scmp.eq.s32.totalorder %s20, 1
    %p122 = scmp.ne.s32.totalorder %s117, %s119
    %p123 = scmp.eq.s32.totalorder %s20, 0
    %p124 = por %p122, %p123
    %p125 = scmp.ne.s32.totalorder %s117, %s119
    %p126 = scmp.eq.s32.totalorder %s25, 1
    %p127 = por %p125, %p126
    %p128 = scmp.ne.s32.totalorder %s119, %s120
    %p129 = scmp.eq.s32.totalorder %s25, 0
    %p130 = por %p128, %p129
    %p131 = scmp.ne.s32.totalorder %s119, %s120
    %p132 = scmp.eq.s32.totalorder %s26, 1
    %p133 = por %p131, %p132
    %p135 = scmp.ne.s32.totalorder %s120, %s134
    %p136 = scmp.eq.s32.totalorder %s26, 0
    %p137 = por %p135, %p136
    %s139 = sadd.s32 %s138, 1
    %p142 = scmp.eq.s32.totalorder %s20, 1
    %p143 = scmp.ne.s32.totalorder %s138, %s140
    %p144 = scmp.eq.s32.totalorder %s20, 0
    %p145 = por %p143, %p144
    %p146 = scmp.ne.s32.totalorder %s138, %s140
    %p147 = scmp.eq.s32.totalorder %s25, 1
    %p148 = por %p146, %p147
    %p149 = scmp.ne.s32.totalorder %s140, %s141
    %p150 = scmp.eq.s32.totalorder %s25, 0
    %p151 = por %p149, %p150
    %p152 = scmp.ne.s32.totalorder %s140, %s141
    %p153 = scmp.eq.s32.totalorder %s26, 1
    %p154 = por %p152, %p153
    %p156 = scmp.ne.s32.totalorder %s141, %s155
    %p157 = scmp.eq.s32.totalorder %s26, 0
    %p158 = por %p156, %p157
    %s160 = sadd.s32 %s159, 1
    %p163 = scmp.eq.s32.totalorder %s20, 1
    %p164 = scmp.ne.s32.totalorder %s159, %s161
    %p165 = scmp.eq.s32.totalorder %s20, 0
    %p166 = por %p164, %p165
    %p167 = scmp.ne.s32.totalorder %s159, %s161
    %p168 = scmp.eq.s32.totalorder %s25, 1
    %p169 = por %p167, %p168
    %p170 = scmp.ne.s32.totalorder %s161, %s162
    %p171 = scmp.eq.s32.totalorder %s25, 0
    %p172 = por %p170, %p171
    %p173 = scmp.ne.s32.totalorder %s161, %s162
    %p174 = scmp.eq.s32.totalorder %s26, 1
    %p175 = por %p173, %p174
    %p177 = scmp.ne.s32.totalorder %s162, %s176
    %p178 = scmp.eq.s32.totalorder %s26, 0
    %p179 = por %p177, %p178
    %s181 = sadd.s32 %s180, 1
    %p184 = scmp.eq.s32.totalorder %s20, 1
    %p185 = scmp.ne.s32.totalorder %s180, %s182
    %p186 = scmp.eq.s32.totalorder %s20, 0
    %p187 = por %p185, %p186
    %p188 = scmp.ne.s32.totalorder %s180, %s182
    %p189 = scmp.eq.s32.totalorder %s25, 1
    %p190 = por %p188, %p189
    %p191 = scmp.ne.s32.totalorder %s182, %s183
    %p192 = scmp.eq.s32.totalorder %s25, 0
    %p193 = por %p191, %p192
    %p194 = scmp.ne.s32.totalorder %s182, %s183
    %p195 = scmp.eq.s32.totalorder %s26, 1
    %p196 = por %p194, %p195
    %p198 = scmp.ne.s32.totalorder %s183, %s197
    %p199 = scmp.eq.s32.totalorder %s26, 0
    %p200 = por %p198, %p199
    %s202 = sadd.s32 %s201, 1
    %p205 = scmp.eq.s32.totalorder %s20, 1
    %p206 = scmp.ne.s32.totalorder %s201, %s203
    %p207 = scmp.eq.s32.totalorder %s20, 0
    %p208 = por %p206, %p207
    %p209 = scmp.ne.s32.totalorder %s201, %s203
    %p210 = scmp.eq.s32.totalorder %s25, 1
    %p211 = por %p209, %p210
    %p212 = scmp.ne.s32.totalorder %s203, %s204
    %p213 = scmp.eq.s32.totalorder %s25, 0
    %p214 = por %p212, %p213
    %p215 = scmp.ne.s32.totalorder %s203, %s204
    %p216 = scmp.eq.s32.totalorder %s26, 1
    %p217 = por %p215, %p216
    %p219 = scmp.ne.s32.totalorder %s204, %s218
    %p220 = scmp.eq.s32.totalorder %s26, 0
    %p221 = por %p219, %p220
    %s222 = ssub.s32 %s20, %s27
    %p223 = scmp.eq.s32.totalorder %s222, 0
    %s225 = sadd.s32 %s224, 1
    %s226 = scalar_select %p223, %s224, %s225
    %p229 = pneg %p223
    %p230 = scmp.eq.s32.totalorder %s20, 1
    %p231 = por %p229, %p230
    %p232 = scmp.ne.s32.totalorder %s224, %s227
    %p233 = scmp.eq.s32.totalorder %s20, 0
    %p234 = por %p232, %p233
    %p235 = scmp.ne.s32.totalorder %s224, %s227
    %p236 = scmp.eq.s32.totalorder %s25, 1
    %p237 = por %p235, %p236
    %p238 = scmp.ne.s32.totalorder %s227, %s228
    %p239 = scmp.eq.s32.totalorder %s25, 0
    %p240 = por %p238, %p239
    %p241 = scmp.ne.s32.totalorder %s227, %s228
    %p242 = scmp.eq.s32.totalorder %s26, 1
    %p243 = por %p241, %p242
    %p245 = scmp.ne.s32.totalorder %s228, %s244
    %p246 = scmp.eq.s32.totalorder %s26, 0
    %p247 = por %p245, %p246
    %s248 = ssub.s32 %s20, %s27
    %p249 = scmp.eq.s32.totalorder %s248, 0
    %s251 = sadd.s32 %s250, 1
    %s252 = scalar_select %p249, %s250, %s251
    %p255 = pneg %p249
    %p256 = scmp.eq.s32.totalorder %s20, 1
    %p257 = por %p255, %p256
    %p258 = scmp.ne.s32.totalorder %s250, %s253
    %p259 = scmp.eq.s32.totalorder %s20, 0
    %p260 = por %p258, %p259
    %p261 = scmp.ne.s32.totalorder %s250, %s253
    %p262 = scmp.eq.s32.totalorder %s25, 1
    %p263 = por %p261, %p262
    %p264 = scmp.ne.s32.totalorder %s253, %s254
    %p265 = scmp.eq.s32.totalorder %s25, 0
    %p266 = por %p264, %p265
    %p267 = scmp.ne.s32.totalorder %s253, %s254
    %p268 = scmp.eq.s32.totalorder %s26, 1
    %p269 = por %p267, %p268
    %p271 = scmp.ne.s32.totalorder %s254, %s270
    %p272 = scmp.eq.s32.totalorder %s26, 0
    %p273 = por %p271, %p272
    %s274 = ssub.s32 %s20, %s27
    %p275 = scmp.eq.s32.totalorder %s274, 0
    %s277 = sadd.s32 %s276, 1
    %s278 = scalar_select %p275, %s276, %s277
    %p281 = pneg %p275
    %p282 = scmp.eq.s32.totalorder %s20, 1
    %p283 = por %p281, %p282
    %p284 = scmp.ne.s32.totalorder %s276, %s279
    %p285 = scmp.eq.s32.totalorder %s20, 0
    %p286 = por %p284, %p285
    %p287 = scmp.ne.s32.totalorder %s276, %s279
    %p288 = scmp.eq.s32.totalorder %s25, 1
    %p289 = por %p287, %p288
    %p290 = scmp.ne.s32.totalorder %s279, %s280
    %p291 = scmp.eq.s32.totalorder %s25, 0
    %p292 = por %p290, %p291
    %p293 = scmp.ne.s32.totalorder %s279, %s280
    %p294 = scmp.eq.s32.totalorder %s26, 1
    %p295 = por %p293, %p294
    %p297 = scmp.ne.s32.totalorder %s280, %s296
    %p298 = scmp.eq.s32.totalorder %s26, 0
    %p299 = por %p297, %p298
    %s300 = ssub.s32 %s20, %s27
    %p301 = scmp.eq.s32.totalorder %s300, 0
    %s303 = sadd.s32 %s302, 1
    %s304 = scalar_select %p301, %s302, %s303
    %p307 = pneg %p301
    %p308 = scmp.eq.s32.totalorder %s20, 1
    %p309 = por %p307, %p308
    %p310 = scmp.ne.s32.totalorder %s302, %s305
    %p311 = scmp.eq.s32.totalorder %s20, 0
    %p312 = por %p310, %p311
    %p313 = scmp.ne.s32.totalorder %s302, %s305
    %p314 = scmp.eq.s32.totalorder %s25, 1
    %p315 = por %p313, %p314
    %p316 = scmp.ne.s32.totalorder %s305, %s306
    %p317 = scmp.eq.s32.totalorder %s25, 0
    %p318 = por %p316, %p317
    %p319 = scmp.ne.s32.totalorder %s305, %s306
    %p320 = scmp.eq.s32.totalorder %s26, 1
    %p321 = por %p319, %p320
    %p323 = scmp.ne.s32.totalorder %s306, %s322
    %p324 = scmp.eq.s32.totalorder %s26, 0
    %p325 = por %p323, %p324
    %p326 = scmp.le.s32.totalorder 1, %s20
    %p327 = scmp.lt.s32.totalorder %s20, 3
    %p328 = pnand %p326, %p327
    %p329 = pneg %p328
    // Predicated region
    $region9: #{tpu_custom_call.1} parent=5 // pred_check
      _
    $region10: #{tpu_custom_call.1} parent=5 // pred_check_branch
      %331 = sbr.rel (%p328) target = $region12
    $region11: #{tpu_custom_call.1} parent=5 // pred_region
      %s332 = ssub.s32 %s20, 1
      // Predicated region
      $region13: #{tpu_custom_call.1} parent=11 // pred_check
        %p333 = pneg %p67
      $region14: #{tpu_custom_call.1} parent=11 // pred_check_branch
        %335 = sbr.rel (%p333) target = $region16
      $region15: #{tpu_custom_call.1} parent=11 // pred_region
        _
      $region16: #{tpu_custom_call.1} parent=11 // pred_fallthru
        _
      // Predicated region
      $region17: #{tpu_custom_call.1} parent=11 // pred_check
        %p336 = pneg %p88
      $region18: #{tpu_custom_call.1} parent=11 // pred_check_branch
        %338 = sbr.rel (%p336) target = $region20
      $region19: #{tpu_custom_call.1} parent=11 // pred_region
        _
      $region20: #{tpu_custom_call.1} parent=11 // pred_fallthru
        _
      // Predicated region
      $region21: #{tpu_custom_call.1} parent=11 // pred_check
        %p339 = pneg %p109
      $region22: #{tpu_custom_call.1} parent=11 // pred_check_branch
        %341 = sbr.rel (%p339) target = $region24
      $region23: #{tpu_custom_call.1} parent=11 // pred_region
        _
      $region24: #{tpu_custom_call.1} parent=11 // pred_fallthru
        _
      // Predicated region
      $region25: #{tpu_custom_call.1} parent=11 // pred_check
        %p342 = pneg %p130
      $region26: #{tpu_custom_call.1} parent=11 // pred_check_branch
        %344 = sbr.rel (%p342) target = $region28
      $region27: #{tpu_custom_call.1} parent=11 // pred_region
        _
      $region28: #{tpu_custom_call.1} parent=11 // pred_fallthru
        _
      // Predicated region
      $region29: #{tpu_custom_call.1} parent=11 // pred_check
        %p345 = pneg %p151
      $region30: #{tpu_custom_call.1} parent=11 // pred_check_branch
        %347 = sbr.rel (%p345) target = $region32
      $region31: #{tpu_custom_call.1} parent=11 // pred_region
        _
      $region32: #{tpu_custom_call.1} parent=11 // pred_fallthru
        _
      // Predicated region
      $region33: #{tpu_custom_call.1} parent=11 // pred_check
        %p348 = pneg %p172
      $region34: #{tpu_custom_call.1} parent=11 // pred_check_branch
        %350 = sbr.rel (%p348) target = $region36
      $region35: #{tpu_custom_call.1} parent=11 // pred_region
        _
      $region36: #{tpu_custom_call.1} parent=11 // pred_fallthru
        _
      // Predicated region
      $region37: #{tpu_custom_call.1} parent=11 // pred_check
        %p351 = pneg %p193
      $region38: #{tpu_custom_call.1} parent=11 // pred_check_branch
        %353 = sbr.rel (%p351) target = $region40
      $region39: #{tpu_custom_call.1} parent=11 // pred_region
        _
      $region40: #{tpu_custom_call.1} parent=11 // pred_fallthru
        _
      // Predicated region
      $region41: #{tpu_custom_call.1} parent=11 // pred_check
        %p354 = pneg %p214
      $region42: #{tpu_custom_call.1} parent=11 // pred_check_branch
        %356 = sbr.rel (%p354) target = $region44
      $region43: #{tpu_custom_call.1} parent=11 // pred_region
        _
      $region44: #{tpu_custom_call.1} parent=11 // pred_fallthru
        _
    $region12: #{tpu_custom_call.1} parent=5 // pred_fallthru
      _
    %p357 = scmp.lt.s32.totalorder %s20, 2
    // Predicated region
    $region45: #{tpu_custom_call.1} parent=5 // pred_check
      %p358 = pneg %p357
    $region46: #{tpu_custom_call.1} parent=5 // pred_check_branch
      %360 = sbr.rel (%p358) target = $region48
    $region47: #{tpu_custom_call.1} parent=5 // pred_region
      // Predicated region
      $region49: #{tpu_custom_call.1} parent=47 // pred_check
        %p361 = pneg %p40
      $region50: #{tpu_custom_call.1} parent=47 // pred_check_branch
        %363 = sbr.rel (%p361) target = $region52
      $region51: #{tpu_custom_call.1} parent=47 // pred_region
        %s364 = smul.u32 16, %s20
        %p365 = scmp.lt.s32.totalorder %s364, 31
        %s366 = scalar_select %p365, %s364, 31
        %s367 = smul.addr %s366, 8
        %s368 = scalar_lea.vmem %s0, %s367
        %s369 = smul.u32 16, %s20
      $region52: #{tpu_custom_call.1} parent=47 // pred_fallthru
        _
      // Predicated region
      $region53: #{tpu_custom_call.1} parent=47 // pred_check
        %p370 = pneg %p234
      $region54: #{tpu_custom_call.1} parent=47 // pred_check_branch
        %372 = sbr.rel (%p370) target = $region56
      $region55: #{tpu_custom_call.1} parent=47 // pred_region
        %s373 = smul.u32 16, %s20
        %p374 = scmp.lt.s32.totalorder %s373, 31
        %s375 = scalar_select %p374, %s373, 31
        %s376 = smul.addr %s375, 8
        %s377 = scalar_lea.vmem %s9, %s376
        %s378 = smul.u32 16, %s20
      $region56: #{tpu_custom_call.1} parent=47 // pred_fallthru
        _
      // Predicated region
      $region57: #{tpu_custom_call.1} parent=47 // pred_check
        %p379 = pneg %p260
      $region58: #{tpu_custom_call.1} parent=47 // pred_check_branch
        %381 = sbr.rel (%p379) target = $region60
      $region59: #{tpu_custom_call.1} parent=47 // pred_region
        %s382 = smul.u32 16, %s20
        %p383 = scmp.lt.s32.totalorder %s382, 31
        %s384 = scalar_select %p383, %s382, 31
        %s385 = smul.addr %s384, 8
        %s386 = scalar_lea.vmem %s10, %s385
        %s387 = smul.u32 16, %s20
      $region60: #{tpu_custom_call.1} parent=47 // pred_fallthru
        _
      // Predicated region
      $region61: #{tpu_custom_call.1} parent=47 // pred_check
        %p388 = pneg %p286
      $region62: #{tpu_custom_call.1} parent=47 // pred_check_branch
        %390 = sbr.rel (%p388) target = $region64
      $region63: #{tpu_custom_call.1} parent=47 // pred_region
        %s391 = smul.u32 16, %s20
        %p392 = scmp.lt.s32.totalorder %s391, 31
        %s393 = scalar_select %p392, %s391, 31
        %s394 = smul.addr %s393, 8
        %s395 = scalar_lea.vmem %s11, %s394
        %s396 = smul.u32 16, %s20
      $region64: #{tpu_custom_call.1} parent=47 // pred_fallthru
        _
    $region48: #{tpu_custom_call.1} parent=5 // pred_fallthru
      _
    %p397 = scmp.le.s32.totalorder 1, %s20
    %p398 = scmp.lt.s32.totalorder %s20, 3
    %p399 = pnand %p397, %p398
    %p400 = pneg %p399
    // Predicated region
    $region65: #{tpu_custom_call.1} parent=5 // pred_check
      _
    $region66: #{tpu_custom_call.1} parent=5 // pred_check_branch
      %402 = sbr.rel (%p399) target = $region68
    $region67: #{tpu_custom_call.1} parent=5 // pred_region
      %s403 = ssub.s32 %s20, 1
      %s404 = smul.u32 16, %s25
      %p405 = scmp.lt.s32.totalorder %s404, 31
      %s406 = scalar_select %p405, %s404, 31
      %s407 = smul.addr %s406, 8
      %s408 = scalar_lea.vmem %s0, %s407
      %p409 = pneg %p46
      %p410 = pneg %p43
      %p411 = pneg %p67
      %p412 = pneg %p64
      %p413 = pneg %p88
      %p414 = pneg %p85
      %p415 = pneg %p109
      %p416 = pneg %p106
      %p417 = pneg %p130
      %p418 = pneg %p127
      %p419 = pneg %p151
      %p420 = pneg %p148
      %p421 = pneg %p172
      %p422 = pneg %p169
      %p423 = pneg %p193
      %p424 = pneg %p190
      %p425 = pneg %p214
      %p426 = pneg %p211
      %s427 = smul.u32 16, %s25
      %p428 = scmp.lt.s32.totalorder %s427, 31
      %s429 = scalar_select %p428, %s427, 31
      %s430 = smul.addr %s429, 8
      %s431 = scalar_lea.vmem %s9, %s430
      %p432 = pneg %p240
      %p433 = pneg %p237
      %s434 = smul.u32 16, %s25
      %p435 = scmp.lt.s32.totalorder %s434, 31
      %s436 = scalar_select %p435, %s434, 31
      %s437 = smul.addr %s436, 8
      %s438 = scalar_lea.vmem %s10, %s437
      %p439 = pneg %p266
      %p440 = pneg %p263
      %s441 = smul.u32 16, %s25
      %p442 = scmp.lt.s32.totalorder %s441, 31
      %s443 = scalar_select %p442, %s441, 31
      %s444 = smul.addr %s443, 8
      %s445 = scalar_lea.vmem %s11, %s444
      %p446 = pneg %p292
      %p447 = pneg %p289
      %p448 = pneg %p318
      %p449 = pneg %p315
      %s450 = smul.u32 16, %s25
      %p451 = scmp.lt.s32.totalorder %s450, 31
      %s452 = scalar_select %p451, %s450, 31
      %s453 = smul.addr %s452, 8
      %s454 = scalar_lea.vmem %s12, %s453
      %s455 = smul.u32 16, %s25
      %p456 = scmp.lt.s32.totalorder %s455, 31
      %s457 = scalar_select %p456, %s455, 31
      %s458 = smul.addr %s457, 8
      %s459 = scalar_lea.vmem %s0, %s458
      %s460 = smul.u32 16, %s25
      %s461 = smul.u32 16, %s25
      %p462 = scmp.lt.s32.totalorder %s461, 31
      %s463 = scalar_select %p462, %s461, 31
      %s464 = smul.addr %s463, 8
      %s465 = scalar_lea.vmem %s9, %s464
      %s466 = smul.u32 16, %s25
      %s467 = smul.u32 16, %s25
      %p468 = scmp.lt.s32.totalorder %s467, 31
      %s469 = scalar_select %p468, %s467, 31
      %s470 = smul.addr %s469, 8
      %s471 = scalar_lea.vmem %s10, %s470
      %s472 = smul.u32 16, %s25
      %s473 = smul.u32 16, %s25
      %p474 = scmp.lt.s32.totalorder %s473, 31
      %s475 = scalar_select %p474, %s473, 31
      %s476 = smul.addr %s475, 8
      %s477 = scalar_lea.vmem %s11, %s476
      %s478 = smul.u32 16, %s25
      %s479 = smul.u32 16, %s25
      %p480 = scmp.lt.s32.totalorder %s479, 31
      %s481 = scalar_select %p480, %s479, 31
      %s482 = smul.addr %s481, 8
      %s483 = scalar_lea.vmem %s12, %s482
      %s484 = smul.u32 16, %s25
      %v485 = vld [vmem:[%s459] sm:$0xff]
      %v486 = vld [vmem:[%s459 + $0x8] sm:$0xff]
      %v487 = vld [vmem:[%s459 + $0x10] sm:$0xff]
      %v488 = vld [vmem:[%s459 + $0x18] sm:$0xff]
      %v489 = vld [vmem:[%s459 + $0x20] sm:$0xff]
      %v490 = vld [vmem:[%s459 + $0x28] sm:$0xff]
      %v491 = vld [vmem:[%s459 + $0x30] sm:$0xff]
      %v492 = vld [vmem:[%s459 + $0x38] sm:$0xff]
      %v493 = vld [vmem:[%s459 + $0x40] sm:$0xff]
      %v494 = vld [vmem:[%s459 + $0x48] sm:$0xff]
      %v495 = vld [vmem:[%s459 + $0x50] sm:$0xff]
      %v496 = vld [vmem:[%s459 + $0x58] sm:$0xff]
      %v497 = vld [vmem:[%s459 + $0x60] sm:$0xff]
      %v498 = vld [vmem:[%s459 + $0x68] sm:$0xff]
      %v499 = vld [vmem:[%s459 + $0x70] sm:$0xff]
      %v500 = vld [vmem:[%s459 + $0x78] sm:$0xff]
      %v501 = vld [vmem:[%s1] sm:$0x1]
      %503 = vset.pattern.permute.xlu0 0
      %504 = vperm.xlu0 %503, %v485
      %v505 = vpop.permute.xlu0 %504
      %508 = vset.pattern.permute.xlu0 0
      %509 = vperm.xlu0 %508, %v486
      %v510 = vpop.permute.xlu0 %509
      %513 = vset.pattern.permute.xlu0 0
      %514 = vperm.xlu0 %513, %v487
      %v515 = vpop.permute.xlu0 %514
      %518 = vset.pattern.permute.xlu0 0
      %519 = vperm.xlu0 %518, %v488
      %v520 = vpop.permute.xlu0 %519
      %523 = vset.pattern.permute.xlu0 0
      %524 = vperm.xlu0 %523, %v489
      %v525 = vpop.permute.xlu0 %524
      %528 = vset.pattern.permute.xlu0 0
      %529 = vperm.xlu0 %528, %v490
      %v530 = vpop.permute.xlu0 %529
      %533 = vset.pattern.permute.xlu0 0
      %534 = vperm.xlu0 %533, %v491
      %v535 = vpop.permute.xlu0 %534
      %538 = vset.pattern.permute.xlu0 0
      %539 = vperm.xlu0 %538, %v492
      %v540 = vpop.permute.xlu0 %539
      %543 = vset.pattern.permute.xlu0 0
      %544 = vperm.xlu0 %543, %v493
      %v545 = vpop.permute.xlu0 %544
      %548 = vset.pattern.permute.xlu0 0
      %549 = vperm.xlu0 %548, %v494
      %v550 = vpop.permute.xlu0 %549
      %553 = vset.pattern.permute.xlu0 0
      %554 = vperm.xlu0 %553, %v495
      %v555 = vpop.permute.xlu0 %554
      %558 = vset.pattern.permute.xlu0 0
      %559 = vperm.xlu0 %558, %v496
      %v560 = vpop.permute.xlu0 %559
      %563 = vset.pattern.permute.xlu0 0
      %564 = vperm.xlu0 %563, %v497
      %v565 = vpop.permute.xlu0 %564
      %568 = vset.pattern.permute.xlu0 0
      %569 = vperm.xlu0 %568, %v498
      %v570 = vpop.permute.xlu0 %569
      %573 = vset.pattern.permute.xlu0 0
      %574 = vperm.xlu0 %573, %v499
      %v575 = vpop.permute.xlu0 %574
      %578 = vset.pattern.permute.xlu0 0
      %579 = vperm.xlu0 %578, %v500
      %v580 = vpop.permute.xlu0 %579
      %v583 = vperm.slane %v501, 0
      %v585 = vmul.f32 %v505, %v583
      %v586 = vmul.f32 %v510, %v583
      %v587 = vmul.f32 %v515, %v583
      %v588 = vmul.f32 %v520, %v583
      %v589 = vmul.f32 %v525, %v583
      %v590 = vmul.f32 %v530, %v583
      %v591 = vmul.f32 %v535, %v583
      %v592 = vmul.f32 %v540, %v583
      %v593 = vmul.f32 %v545, %v583
      %v594 = vmul.f32 %v550, %v583
      %v595 = vmul.f32 %v555, %v583
      %v596 = vmul.f32 %v560, %v583
      %v597 = vmul.f32 %v565, %v583
      %v598 = vmul.f32 %v570, %v583
      %v599 = vmul.f32 %v575, %v583
      %v600 = vmul.f32 %v580, %v583
      %v601 = vld [vmem:[%s2] sm:$0x1]
      %v603 = vperm.slane %v601, 0
      %v605 = vadd.f32 %v585, %v603
      %v606 = vadd.f32 %v586, %v603
      %v607 = vadd.f32 %v587, %v603
      %v608 = vadd.f32 %v588, %v603
      %v609 = vadd.f32 %v589, %v603
      %v610 = vadd.f32 %v590, %v603
      %v611 = vadd.f32 %v591, %v603
      %v612 = vadd.f32 %v592, %v603
      %v613 = vadd.f32 %v593, %v603
      %v614 = vadd.f32 %v594, %v603
      %v615 = vadd.f32 %v595, %v603
      %v616 = vadd.f32 %v596, %v603
      %v617 = vadd.f32 %v597, %v603
      %v618 = vadd.f32 %v598, %v603
      %v619 = vadd.f32 %v599, %v603
      %v620 = vadd.f32 %v600, %v603
      %v621 = vmax.f32 %v605, 0.0
      %v622 = vmax.f32 %v606, 0.0
      %v623 = vmax.f32 %v607, 0.0
      %v624 = vmax.f32 %v608, 0.0
      %v625 = vmax.f32 %v609, 0.0
      %v626 = vmax.f32 %v610, 0.0
      %v627 = vmax.f32 %v611, 0.0
      %v628 = vmax.f32 %v612, 0.0
      %v629 = vmax.f32 %v613, 0.0
      %v630 = vmax.f32 %v614, 0.0
      %v631 = vmax.f32 %v615, 0.0
      %v632 = vmax.f32 %v616, 0.0
      %v633 = vmax.f32 %v617, 0.0
      %v634 = vmax.f32 %v618, 0.0
      %v635 = vmax.f32 %v619, 0.0
      %v636 = vmax.f32 %v620, 0.0
      %v637 = vld [vmem:[%s465] sm:$0xff]
      %v638 = vld [vmem:[%s465 + $0x8] sm:$0xff]
      %v639 = vld [vmem:[%s465 + $0x10] sm:$0xff]
      %v640 = vld [vmem:[%s465 + $0x18] sm:$0xff]
      %v641 = vld [vmem:[%s465 + $0x20] sm:$0xff]
      %v642 = vld [vmem:[%s465 + $0x28] sm:$0xff]
      %v643 = vld [vmem:[%s465 + $0x30] sm:$0xff]
      %v644 = vld [vmem:[%s465 + $0x38] sm:$0xff]
      %v645 = vld [vmem:[%s465 + $0x40] sm:$0xff]
      %v646 = vld [vmem:[%s465 + $0x48] sm:$0xff]
      %v647 = vld [vmem:[%s465 + $0x50] sm:$0xff]
      %v648 = vld [vmem:[%s465 + $0x58] sm:$0xff]
      %v649 = vld [vmem:[%s465 + $0x60] sm:$0xff]
      %v650 = vld [vmem:[%s465 + $0x68] sm:$0xff]
      %v651 = vld [vmem:[%s465 + $0x70] sm:$0xff]
      %v652 = vld [vmem:[%s465 + $0x78] sm:$0xff]
      %v653 = vadd.s32 %v637, 2147483648
      %vm655 = vcmp.lt.s32.totalorder %v653, 0
      %v656 = vadd.s32 %v638, 2147483648
      %vm658 = vcmp.lt.s32.totalorder %v656, 0
      %v659 = vadd.s32 %v639, 2147483648
      %vm661 = vcmp.lt.s32.totalorder %v659, 0
      %v662 = vadd.s32 %v640, 2147483648
      %vm664 = vcmp.lt.s32.totalorder %v662, 0
      %v665 = vadd.s32 %v641, 2147483648
      %vm667 = vcmp.lt.s32.totalorder %v665, 0
      %v668 = vadd.s32 %v642, 2147483648
      %vm670 = vcmp.lt.s32.totalorder %v668, 0
      %v671 = vadd.s32 %v643, 2147483648
      %vm673 = vcmp.lt.s32.totalorder %v671, 0
      %v674 = vadd.s32 %v644, 2147483648
      %vm676 = vcmp.lt.s32.totalorder %v674, 0
      %v677 = vadd.s32 %v645, 2147483648
      %vm679 = vcmp.lt.s32.totalorder %v677, 0
      %v680 = vadd.s32 %v646, 2147483648
      %vm682 = vcmp.lt.s32.totalorder %v680, 0
      %v683 = vadd.s32 %v647, 2147483648
      %vm685 = vcmp.lt.s32.totalorder %v683, 0
      %v686 = vadd.s32 %v648, 2147483648
      %vm688 = vcmp.lt.s32.totalorder %v686, 0
      %v689 = vadd.s32 %v649, 2147483648
      %vm691 = vcmp.lt.s32.totalorder %v689, 0
      %v692 = vadd.s32 %v650, 2147483648
      %vm694 = vcmp.lt.s32.totalorder %v692, 0
      %v695 = vadd.s32 %v651, 2147483648
      %vm697 = vcmp.lt.s32.totalorder %v695, 0
      %v698 = vadd.s32 %v652, 2147483648
      %vm700 = vcmp.lt.s32.totalorder %v698, 0
      %v701 = vmul.f32 %v621, 2.0
      %v702 = vmul.f32 %v622, 2.0
      %v703 = vmul.f32 %v623, 2.0
      %v704 = vmul.f32 %v624, 2.0
      %v705 = vmul.f32 %v625, 2.0
      %v706 = vmul.f32 %v626, 2.0
      %v707 = vmul.f32 %v627, 2.0
      %v708 = vmul.f32 %v628, 2.0
      %v709 = vmul.f32 %v629, 2.0
      %v710 = vmul.f32 %v630, 2.0
      %v711 = vmul.f32 %v631, 2.0
      %v712 = vmul.f32 %v632, 2.0
      %v713 = vmul.f32 %v633, 2.0
      %v714 = vmul.f32 %v634, 2.0
      %v715 = vmul.f32 %v635, 2.0
      %v716 = vmul.f32 %v636, 2.0
      %v717 = vsel %vm655, %v701, 0.0
      %v718 = vsel %vm658, %v702, 0.0
      %v719 = vsel %vm661, %v703, 0.0
      %v720 = vsel %vm664, %v704, 0.0
      %v721 = vsel %vm667, %v705, 0.0
      %v722 = vsel %vm670, %v706, 0.0
      %v723 = vsel %vm673, %v707, 0.0
      %v724 = vsel %vm676, %v708, 0.0
      %v725 = vsel %vm679, %v709, 0.0
      %v726 = vsel %vm682, %v710, 0.0
      %v727 = vsel %vm685, %v711, 0.0
      %v728 = vsel %vm688, %v712, 0.0
      %v729 = vsel %vm691, %v713, 0.0
      %v730 = vsel %vm694, %v714, 0.0
      %v731 = vsel %vm697, %v715, 0.0
      %v732 = vsel %vm700, %v716, 0.0
      %v733 = vld [vmem:[%s3] sm:$0xff]
      %v734 = vld [vmem:[%s3 + $0x8] sm:$0xff]
      %v735 = vld [vmem:[%s3 + $0x10] sm:$0xff]
      %v736 = vld [vmem:[%s3 + $0x18] sm:$0xff]
      %v737 = vld [vmem:[%s4] sm:$0x1]
      %v739 = vperm.slane %v737, 0
      %vm741 = vcmask 261120
      %v743 = vsel %vm741, %v717, 0
      %v746 = vsel %vm741, %v718, 0
      %v749 = vsel %vm741, %v719, 0
      %v752 = vsel %vm741, %v720, 0
      %v755 = vsel %vm741, %v721, 0
      %v758 = vsel %vm741, %v722, 0
      %v761 = vsel %vm741, %v723, 0
      %v764 = vsel %vm741, %v724, 0
      %v767 = vsel %vm741, %v725, 0
      %v770 = vsel %vm741, %v726, 0
      %v773 = vsel %vm741, %v727, 0
      %v776 = vsel %vm741, %v728, 0
      %v779 = vsel %vm741, %v729, 0
      %v782 = vsel %vm741, %v730, 0
      %v785 = vsel %vm741, %v731, 0
      %v788 = vsel %vm741, %v732, 0
      %790 = vmatpush.msra.mxu0 0.0
      %791 = vmatpush.msra.mxu0 0.0
      %792 = vmatpush.msra.mxu0 0.0
      %793 = vmatpush.msra.mxu0 0.0
      %794 = vmatpush.msra.mxu0 0.0
      %795 = vmatpush.msra.mxu0 0.0
      %796 = vmatpush.msra.mxu0 0.0
      %797 = vmatpush.msra.mxu0 0.0
      %798 = vmatpush.msra.mxu0 0.0
      %799 = vmatpush.msra.mxu0 0.0
      %800 = vmatpush.msra.mxu0 0.0
      %801 = vmatpush.msra.mxu0 0.0
      %802 = vmatpush.msra.mxu0 %v736
      %803 = vmatpush.msra.mxu0 %v735
      %804 = vmatpush.msra.mxu0 %v734
      %805 = vmatpush.msra.mxu0 %v733
      %806 = vmatmul.f32.gmra.mxu0 %v743
      %v807 = vpop.f32.mrf.mxu0
      %v808 = vadd.f32 %v739, %v807
      %809 = vmatmul.f32.gmra.mxu0 %v746
      %v810 = vpop.f32.mrf.mxu0
      %v811 = vadd.f32 %v739, %v810
      %812 = vmatmul.f32.gmra.mxu0 %v749
      %v813 = vpop.f32.mrf.mxu0
      %v814 = vadd.f32 %v739, %v813
      %815 = vmatmul.f32.gmra.mxu0 %v752
      %v816 = vpop.f32.mrf.mxu0
      %v817 = vadd.f32 %v739, %v816
      %818 = vmatmul.f32.gmra.mxu0 %v755
      %v819 = vpop.f32.mrf.mxu0
      %v820 = vadd.f32 %v739, %v819
      %821 = vmatmul.f32.gmra.mxu0 %v758
      %v822 = vpop.f32.mrf.mxu0
      %v823 = vadd.f32 %v739, %v822
      %824 = vmatmul.f32.gmra.mxu0 %v761
      %v825 = vpop.f32.mrf.mxu0
      %v826 = vadd.f32 %v739, %v825
      %827 = vmatmul.f32.gmra.mxu0 %v764
      %v828 = vpop.f32.mrf.mxu0
      %v829 = vadd.f32 %v739, %v828
      %830 = vmatmul.f32.gmra.mxu0 %v767
      %v831 = vpop.f32.mrf.mxu0
      %v832 = vadd.f32 %v739, %v831
      %833 = vmatmul.f32.gmra.mxu0 %v770
      %v834 = vpop.f32.mrf.mxu0
      %v835 = vadd.f32 %v739, %v834
      %836 = vmatmul.f32.gmra.mxu0 %v773
      %v837 = vpop.f32.mrf.mxu0
      %v838 = vadd.f32 %v739, %v837
      %839 = vmatmul.f32.gmra.mxu0 %v776
      %v840 = vpop.f32.mrf.mxu0
      %v841 = vadd.f32 %v739, %v840
      %842 = vmatmul.f32.gmra.mxu0 %v779
      %v843 = vpop.f32.mrf.mxu0
      %v844 = vadd.f32 %v739, %v843
      %845 = vmatmul.f32.gmra.mxu0 %v782
      %v846 = vpop.f32.mrf.mxu0
      %v847 = vadd.f32 %v739, %v846
      %848 = vmatmul.f32.gmra.mxu0 %v785
      %v849 = vpop.f32.mrf.mxu0
      %v850 = vadd.f32 %v739, %v849
      %851 = vmatmul.f32.gmra.mxu0 %v788
      %v852 = vpop.f32.mrf.mxu0
      %v853 = vadd.f32 %v739, %v852
      %854 = vdwg.mxu0
      %v855 = vmax.f32 %v808, 0.0
      %v856 = vmax.f32 %v811, 0.0
      %v857 = vmax.f32 %v814, 0.0
      %v858 = vmax.f32 %v817, 0.0
      %v859 = vmax.f32 %v820, 0.0
      %v860 = vmax.f32 %v823, 0.0
      %v861 = vmax.f32 %v826, 0.0
      %v862 = vmax.f32 %v829, 0.0
      %v863 = vmax.f32 %v832, 0.0
      %v864 = vmax.f32 %v835, 0.0
      %v865 = vmax.f32 %v838, 0.0
      %v866 = vmax.f32 %v841, 0.0
      %v867 = vmax.f32 %v844, 0.0
      %v868 = vmax.f32 %v847, 0.0
      %v869 = vmax.f32 %v850, 0.0
      %v870 = vmax.f32 %v853, 0.0
      %v871 = vld [vmem:[%s471] sm:$0xff]
      %v872 = vld [vmem:[%s471 + $0x8] sm:$0xff]
      %v873 = vld [vmem:[%s471 + $0x10] sm:$0xff]
      %v874 = vld [vmem:[%s471 + $0x18] sm:$0xff]
      %v875 = vld [vmem:[%s471 + $0x20] sm:$0xff]
      %v876 = vld [vmem:[%s471 + $0x28] sm:$0xff]
      %v877 = vld [vmem:[%s471 + $0x30] sm:$0xff]
      %v878 = vld [vmem:[%s471 + $0x38] sm:$0xff]
      %v879 = vld [vmem:[%s471 + $0x40] sm:$0xff]
      %v880 = vld [vmem:[%s471 + $0x48] sm:$0xff]
      %v881 = vld [vmem:[%s471 + $0x50] sm:$0xff]
      %v882 = vld [vmem:[%s471 + $0x58] sm:$0xff]
      %v883 = vld [vmem:[%s471 + $0x60] sm:$0xff]
      %v884 = vld [vmem:[%s471 + $0x68] sm:$0xff]
      %v885 = vld [vmem:[%s471 + $0x70] sm:$0xff]
      %v886 = vld [vmem:[%s471 + $0x78] sm:$0xff]
      %v887 = vadd.s32 %v871, 2147483648
      %vm889 = vcmp.lt.s32.totalorder %v887, 0
      %v890 = vadd.s32 %v872, 2147483648
      %vm892 = vcmp.lt.s32.totalorder %v890, 0
      %v893 = vadd.s32 %v873, 2147483648
      %vm895 = vcmp.lt.s32.totalorder %v893, 0
      %v896 = vadd.s32 %v874, 2147483648
      %vm898 = vcmp.lt.s32.totalorder %v896, 0
      %v899 = vadd.s32 %v875, 2147483648
      %vm901 = vcmp.lt.s32.totalorder %v899, 0
      %v902 = vadd.s32 %v876, 2147483648
      %vm904 = vcmp.lt.s32.totalorder %v902, 0
      %v905 = vadd.s32 %v877, 2147483648
      %vm907 = vcmp.lt.s32.totalorder %v905, 0
      %v908 = vadd.s32 %v878, 2147483648
      %vm910 = vcmp.lt.s32.totalorder %v908, 0
      %v911 = vadd.s32 %v879, 2147483648
      %vm913 = vcmp.lt.s32.totalorder %v911, 0
      %v914 = vadd.s32 %v880, 2147483648
      %vm916 = vcmp.lt.s32.totalorder %v914, 0
      %v917 = vadd.s32 %v881, 2147483648
      %vm919 = vcmp.lt.s32.totalorder %v917, 0
      %v920 = vadd.s32 %v882, 2147483648
      %vm922 = vcmp.lt.s32.totalorder %v920, 0
      %v923 = vadd.s32 %v883, 2147483648
      %vm925 = vcmp.lt.s32.totalorder %v923, 0
      %v926 = vadd.s32 %v884, 2147483648
      %vm928 = vcmp.lt.s32.totalorder %v926, 0
      %v929 = vadd.s32 %v885, 2147483648
      %vm931 = vcmp.lt.s32.totalorder %v929, 0
      %v932 = vadd.s32 %v886, 2147483648
      %vm934 = vcmp.lt.s32.totalorder %v932, 0
      %v935 = vmul.f32 %v855, 2.0
      %v936 = vmul.f32 %v856, 2.0
      %v937 = vmul.f32 %v857, 2.0
      %v938 = vmul.f32 %v858, 2.0
      %v939 = vmul.f32 %v859, 2.0
      %v940 = vmul.f32 %v860, 2.0
      %v941 = vmul.f32 %v861, 2.0
      %v942 = vmul.f32 %v862, 2.0
      %v943 = vmul.f32 %v863, 2.0
      %v944 = vmul.f32 %v864, 2.0
      %v945 = vmul.f32 %v865, 2.0
      %v946 = vmul.f32 %v866, 2.0
      %v947 = vmul.f32 %v867, 2.0
      %v948 = vmul.f32 %v868, 2.0
      %v949 = vmul.f32 %v869, 2.0
      %v950 = vmul.f32 %v870, 2.0
      %v951 = vsel %vm889, %v935, 0.0
      %v952 = vsel %vm892, %v936, 0.0
      %v953 = vsel %vm895, %v937, 0.0
      %v954 = vsel %vm898, %v938, 0.0
      %v955 = vsel %vm901, %v939, 0.0
      %v956 = vsel %vm904, %v940, 0.0
      %v957 = vsel %vm907, %v941, 0.0
      %v958 = vsel %vm910, %v942, 0.0
      %v959 = vsel %vm913, %v943, 0.0
      %v960 = vsel %vm916, %v944, 0.0
      %v961 = vsel %vm919, %v945, 0.0
      %v962 = vsel %vm922, %v946, 0.0
      %v963 = vsel %vm925, %v947, 0.0
      %v964 = vsel %vm928, %v948, 0.0
      %v965 = vsel %vm931, %v949, 0.0
      %v966 = vsel %vm934, %v950, 0.0
      %v967 = vld [vmem:[%s5] sm:$0xff]
      %v968 = vld [vmem:[%s5 + $0x8] sm:$0xff]
      %v969 = vld [vmem:[%s5 + $0x10] sm:$0xff]
      %v970 = vld [vmem:[%s5 + $0x18] sm:$0xff]
      %v971 = vld [vmem:[%s6] sm:$0x1]
      %v973 = vperm.slane %v971, 0
      %v976 = vsel %vm741, %v951, 0
      %v979 = vsel %vm741, %v952, 0
      %v982 = vsel %vm741, %v953, 0
      %v985 = vsel %vm741, %v954, 0
      %v988 = vsel %vm741, %v955, 0
      %v991 = vsel %vm741, %v956, 0
      %v994 = vsel %vm741, %v957, 0
      %v997 = vsel %vm741, %v958, 0
      %v1000 = vsel %vm741, %v959, 0
      %v1003 = vsel %vm741, %v960, 0
      %v1006 = vsel %vm741, %v961, 0
      %v1009 = vsel %vm741, %v962, 0
      %v1012 = vsel %vm741, %v963, 0
      %v1015 = vsel %vm741, %v964, 0
      %v1018 = vsel %vm741, %v965, 0
      %v1021 = vsel %vm741, %v966, 0
      %1023 = vmatpush.msra.mxu0 0.0
      %1024 = vmatpush.msra.mxu0 0.0
      %1025 = vmatpush.msra.mxu0 0.0
      %1026 = vmatpush.msra.mxu0 0.0
      %1027 = vmatpush.msra.mxu0 0.0
      %1028 = vmatpush.msra.mxu0 0.0
      %1029 = vmatpush.msra.mxu0 0.0
      %1030 = vmatpush.msra.mxu0 0.0
      %1031 = vmatpush.msra.mxu0 0.0
      %1032 = vmatpush.msra.mxu0 0.0
      %1033 = vmatpush.msra.mxu0 0.0
      %1034 = vmatpush.msra.mxu0 0.0
      %1035 = vmatpush.msra.mxu0 %v970
      %1036 = vmatpush.msra.mxu0 %v969
      %1037 = vmatpush.msra.mxu0 %v968
      %1038 = vmatpush.msra.mxu0 %v967
      %1039 = vmatmul.f32.gmra.mxu0 %v976
      %v1040 = vpop.f32.mrf.mxu0
      %v1041 = vadd.f32 %v973, %v1040
      %1042 = vmatmul.f32.gmra.mxu0 %v979
      %v1043 = vpop.f32.mrf.mxu0
      %v1044 = vadd.f32 %v973, %v1043
      %1045 = vmatmul.f32.gmra.mxu0 %v982
      %v1046 = vpop.f32.mrf.mxu0
      %v1047 = vadd.f32 %v973, %v1046
      %1048 = vmatmul.f32.gmra.mxu0 %v985
      %v1049 = vpop.f32.mrf.mxu0
      %v1050 = vadd.f32 %v973, %v1049
      %1051 = vmatmul.f32.gmra.mxu0 %v988
      %v1052 = vpop.f32.mrf.mxu0
      %v1053 = vadd.f32 %v973, %v1052
      %1054 = vmatmul.f32.gmra.mxu0 %v991
      %v1055 = vpop.f32.mrf.mxu0
      %v1056 = vadd.f32 %v973, %v1055
      %1057 = vmatmul.f32.gmra.mxu0 %v994
      %v1058 = vpop.f32.mrf.mxu0
      %v1059 = vadd.f32 %v973, %v1058
      %1060 = vmatmul.f32.gmra.mxu0 %v997
      %v1061 = vpop.f32.mrf.mxu0
      %v1062 = vadd.f32 %v973, %v1061
      %1063 = vmatmul.f32.gmra.mxu0 %v1000
      %v1064 = vpop.f32.mrf.mxu0
      %v1065 = vadd.f32 %v973, %v1064
      %1066 = vmatmul.f32.gmra.mxu0 %v1003
      %v1067 = vpop.f32.mrf.mxu0
      %v1068 = vadd.f32 %v973, %v1067
      %1069 = vmatmul.f32.gmra.mxu0 %v1006
      %v1070 = vpop.f32.mrf.mxu0
      %v1071 = vadd.f32 %v973, %v1070
      %1072 = vmatmul.f32.gmra.mxu0 %v1009
      %v1073 = vpop.f32.mrf.mxu0
      %v1074 = vadd.f32 %v973, %v1073
      %1075 = vmatmul.f32.gmra.mxu0 %v1012
      %v1076 = vpop.f32.mrf.mxu0
      %v1077 = vadd.f32 %v973, %v1076
      %1078 = vmatmul.f32.gmra.mxu0 %v1015
      %v1079 = vpop.f32.mrf.mxu0
      %v1080 = vadd.f32 %v973, %v1079
      %1081 = vmatmul.f32.gmra.mxu0 %v1018
      %v1082 = vpop.f32.mrf.mxu0
      %v1083 = vadd.f32 %v973, %v1082
      %1084 = vmatmul.f32.gmra.mxu0 %v1021
      %v1085 = vpop.f32.mrf.mxu0
      %v1086 = vadd.f32 %v973, %v1085
      %1087 = vdwg.mxu0
      %v1088 = vmax.f32 %v1041, 0.0
      %v1089 = vmax.f32 %v1044, 0.0
      %v1090 = vmax.f32 %v1047, 0.0
      %v1091 = vmax.f32 %v1050, 0.0
      %v1092 = vmax.f32 %v1053, 0.0
      %v1093 = vmax.f32 %v1056, 0.0
      %v1094 = vmax.f32 %v1059, 0.0
      %v1095 = vmax.f32 %v1062, 0.0
      %v1096 = vmax.f32 %v1065, 0.0
      %v1097 = vmax.f32 %v1068, 0.0
      %v1098 = vmax.f32 %v1071, 0.0
      %v1099 = vmax.f32 %v1074, 0.0
      %v1100 = vmax.f32 %v1077, 0.0
      %v1101 = vmax.f32 %v1080, 0.0
      %v1102 = vmax.f32 %v1083, 0.0
      %v1103 = vmax.f32 %v1086, 0.0
      %v1104 = vld [vmem:[%s477] sm:$0xff]
      %v1105 = vld [vmem:[%s477 + $0x8] sm:$0xff]
      %v1106 = vld [vmem:[%s477 + $0x10] sm:$0xff]
      %v1107 = vld [vmem:[%s477 + $0x18] sm:$0xff]
      %v1108 = vld [vmem:[%s477 + $0x20] sm:$0xff]
      %v1109 = vld [vmem:[%s477 + $0x28] sm:$0xff]
      %v1110 = vld [vmem:[%s477 + $0x30] sm:$0xff]
      %v1111 = vld [vmem:[%s477 + $0x38] sm:$0xff]
      %v1112 = vld [vmem:[%s477 + $0x40] sm:$0xff]
      %v1113 = vld [vmem:[%s477 + $0x48] sm:$0xff]
      %v1114 = vld [vmem:[%s477 + $0x50] sm:$0xff]
      %v1115 = vld [vmem:[%s477 + $0x58] sm:$0xff]
      %v1116 = vld [vmem:[%s477 + $0x60] sm:$0xff]
      %v1117 = vld [vmem:[%s477 + $0x68] sm:$0xff]
      %v1118 = vld [vmem:[%s477 + $0x70] sm:$0xff]
      %v1119 = vld [vmem:[%s477 + $0x78] sm:$0xff]
      %v1120 = vadd.s32 %v1104, 2147483648
      %vm1122 = vcmp.lt.s32.totalorder %v1120, 0
      %v1123 = vadd.s32 %v1105, 2147483648
      %vm1125 = vcmp.lt.s32.totalorder %v1123, 0
      %v1126 = vadd.s32 %v1106, 2147483648
      %vm1128 = vcmp.lt.s32.totalorder %v1126, 0
      %v1129 = vadd.s32 %v1107, 2147483648
      %vm1131 = vcmp.lt.s32.totalorder %v1129, 0
      %v1132 = vadd.s32 %v1108, 2147483648
      %vm1134 = vcmp.lt.s32.totalorder %v1132, 0
      %v1135 = vadd.s32 %v1109, 2147483648
      %vm1137 = vcmp.lt.s32.totalorder %v1135, 0
      %v1138 = vadd.s32 %v1110, 2147483648
      %vm1140 = vcmp.lt.s32.totalorder %v1138, 0
      %v1141 = vadd.s32 %v1111, 2147483648
      %vm1143 = vcmp.lt.s32.totalorder %v1141, 0
      %v1144 = vadd.s32 %v1112, 2147483648
      %vm1146 = vcmp.lt.s32.totalorder %v1144, 0
      %v1147 = vadd.s32 %v1113, 2147483648
      %vm1149 = vcmp.lt.s32.totalorder %v1147, 0
      %v1150 = vadd.s32 %v1114, 2147483648
      %vm1152 = vcmp.lt.s32.totalorder %v1150, 0
      %v1153 = vadd.s32 %v1115, 2147483648
      %vm1155 = vcmp.lt.s32.totalorder %v1153, 0
      %v1156 = vadd.s32 %v1116, 2147483648
      %vm1158 = vcmp.lt.s32.totalorder %v1156, 0
      %v1159 = vadd.s32 %v1117, 2147483648
      %vm1161 = vcmp.lt.s32.totalorder %v1159, 0
      %v1162 = vadd.s32 %v1118, 2147483648
      %vm1164 = vcmp.lt.s32.totalorder %v1162, 0
      %v1165 = vadd.s32 %v1119, 2147483648
      %vm1167 = vcmp.lt.s32.totalorder %v1165, 0
      %v1168 = vmul.f32 %v1088, 2.0
      %v1169 = vmul.f32 %v1089, 2.0
      %v1170 = vmul.f32 %v1090, 2.0
      %v1171 = vmul.f32 %v1091, 2.0
      %v1172 = vmul.f32 %v1092, 2.0
      %v1173 = vmul.f32 %v1093, 2.0
      %v1174 = vmul.f32 %v1094, 2.0
      %v1175 = vmul.f32 %v1095, 2.0
      %v1176 = vmul.f32 %v1096, 2.0
      %v1177 = vmul.f32 %v1097, 2.0
      %v1178 = vmul.f32 %v1098, 2.0
      %v1179 = vmul.f32 %v1099, 2.0
      %v1180 = vmul.f32 %v1100, 2.0
      %v1181 = vmul.f32 %v1101, 2.0
      %v1182 = vmul.f32 %v1102, 2.0
      %v1183 = vmul.f32 %v1103, 2.0
      %v1184 = vsel %vm1122, %v1168, 0.0
      %v1185 = vsel %vm1125, %v1169, 0.0
      %v1186 = vsel %vm1128, %v1170, 0.0
      %v1187 = vsel %vm1131, %v1171, 0.0
      %v1188 = vsel %vm1134, %v1172, 0.0
      %v1189 = vsel %vm1137, %v1173, 0.0
      %v1190 = vsel %vm1140, %v1174, 0.0
      %v1191 = vsel %vm1143, %v1175, 0.0
      %v1192 = vsel %vm1146, %v1176, 0.0
      %v1193 = vsel %vm1149, %v1177, 0.0
      %v1194 = vsel %vm1152, %v1178, 0.0
      %v1195 = vsel %vm1155, %v1179, 0.0
      %v1196 = vsel %vm1158, %v1180, 0.0
      %v1197 = vsel %vm1161, %v1181, 0.0
      %v1198 = vsel %vm1164, %v1182, 0.0
      %v1199 = vsel %vm1167, %v1183, 0.0
      %v1200 = vld [vmem:[%s7] sm:$0x1]
      %v1202 = vperm.slane %v1200, 0
      %v1204 = vmul.f32 %v1184, %v1202
      %v1205 = vmul.f32 %v1185, %v1202
      %v1206 = vmul.f32 %v1186, %v1202
      %v1207 = vmul.f32 %v1187, %v1202
      %v1208 = vmul.f32 %v1188, %v1202
      %v1209 = vmul.f32 %v1189, %v1202
      %v1210 = vmul.f32 %v1190, %v1202
      %v1211 = vmul.f32 %v1191, %v1202
      %v1212 = vmul.f32 %v1192, %v1202
      %v1213 = vmul.f32 %v1193, %v1202
      %v1214 = vmul.f32 %v1194, %v1202
      %v1215 = vmul.f32 %v1195, %v1202
      %v1216 = vmul.f32 %v1196, %v1202
      %v1217 = vmul.f32 %v1197, %v1202
      %v1218 = vmul.f32 %v1198, %v1202
      %v1219 = vmul.f32 %v1199, %v1202
      %v1220 = vsel %vm741, %v1204, 0.0
      %1221 = vadd.xlane.f32.xlu0 %v1220
      %v1222 = vpop.xlane.xlu0 %1221
      %v1223 = vsel %vm741, %v1205, 0.0
      %1224 = vadd.xlane.f32.xlu0 %v1223
      %v1225 = vpop.xlane.xlu0 %1224
      %v1226 = vsel %vm741, %v1206, 0.0
      %1227 = vadd.xlane.f32.xlu0 %v1226
      %v1228 = vpop.xlane.xlu0 %1227
      %v1229 = vsel %vm741, %v1207, 0.0
      %1230 = vadd.xlane.f32.xlu0 %v1229
      %v1231 = vpop.xlane.xlu0 %1230
      %v1232 = vsel %vm741, %v1208, 0.0
      %1233 = vadd.xlane.f32.xlu0 %v1232
      %v1234 = vpop.xlane.xlu0 %1233
      %v1235 = vsel %vm741, %v1209, 0.0
      %1236 = vadd.xlane.f32.xlu0 %v1235
      %v1237 = vpop.xlane.xlu0 %1236
      %v1238 = vsel %vm741, %v1210, 0.0
      %1239 = vadd.xlane.f32.xlu0 %v1238
      %v1240 = vpop.xlane.xlu0 %1239
      %v1241 = vsel %vm741, %v1211, 0.0
      %1242 = vadd.xlane.f32.xlu0 %v1241
      %v1243 = vpop.xlane.xlu0 %1242
      %v1244 = vsel %vm741, %v1212, 0.0
      %1245 = vadd.xlane.f32.xlu0 %v1244
      %v1246 = vpop.xlane.xlu0 %1245
      %v1247 = vsel %vm741, %v1213, 0.0
      %1248 = vadd.xlane.f32.xlu0 %v1247
      %v1249 = vpop.xlane.xlu0 %1248
      %v1250 = vsel %vm741, %v1214, 0.0
      %1251 = vadd.xlane.f32.xlu0 %v1250
      %v1252 = vpop.xlane.xlu0 %1251
      %v1253 = vsel %vm741, %v1215, 0.0
      %1254 = vadd.xlane.f32.xlu0 %v1253
      %v1255 = vpop.xlane.xlu0 %1254
      %v1256 = vsel %vm741, %v1216, 0.0
      %1257 = vadd.xlane.f32.xlu0 %v1256
      %v1258 = vpop.xlane.xlu0 %1257
      %v1259 = vsel %vm741, %v1217, 0.0
      %1260 = vadd.xlane.f32.xlu0 %v1259
      %v1261 = vpop.xlane.xlu0 %1260
      %v1262 = vsel %vm741, %v1218, 0.0
      %1263 = vadd.xlane.f32.xlu0 %v1262
      %v1264 = vpop.xlane.xlu0 %1263
      %v1265 = vsel %vm741, %v1219, 0.0
      %1266 = vadd.xlane.f32.xlu0 %v1265
      %v1267 = vpop.xlane.xlu0 %1266
      %v1268 = vld [vmem:[#allocation2] sm:$0x1]
      %v1270 = vperm.slane %v1268, 0
      %v1272 = vadd.f32 %v1222, %v1270
      %v1273 = vadd.f32 %v1225, %v1270
      %v1274 = vadd.f32 %v1228, %v1270
      %v1275 = vadd.f32 %v1231, %v1270
      %v1276 = vadd.f32 %v1234, %v1270
      %v1277 = vadd.f32 %v1237, %v1270
      %v1278 = vadd.f32 %v1240, %v1270
      %v1279 = vadd.f32 %v1243, %v1270
      %v1280 = vadd.f32 %v1246, %v1270
      %v1281 = vadd.f32 %v1249, %v1270
      %v1282 = vadd.f32 %v1252, %v1270
      %v1283 = vadd.f32 %v1255, %v1270
      %v1284 = vadd.f32 %v1258, %v1270
      %v1285 = vadd.f32 %v1261, %v1270
      %v1286 = vadd.f32 %v1264, %v1270
      %v1287 = vadd.f32 %v1267, %v1270
      %vm1288 = vcmask 7168
      %1289 = vst.msk [vmem:[%s483] sm:$0xff] %vm1288, %v1272
      %1290 = vst.msk [vmem:[%s483 + $0x8] sm:$0xff] %vm1288, %v1273
      %1291 = vst.msk [vmem:[%s483 + $0x10] sm:$0xff] %vm1288, %v1274
      %1292 = vst.msk [vmem:[%s483 + $0x18] sm:$0xff] %vm1288, %v1275
      %1293 = vst.msk [vmem:[%s483 + $0x20] sm:$0xff] %vm1288, %v1276
      %1294 = vst.msk [vmem:[%s483 + $0x28] sm:$0xff] %vm1288, %v1277
      %1295 = vst.msk [vmem:[%s483 + $0x30] sm:$0xff] %vm1288, %v1278
      %1296 = vst.msk [vmem:[%s483 + $0x38] sm:$0xff] %vm1288, %v1279
      %1297 = vst.msk [vmem:[%s483 + $0x40] sm:$0xff] %vm1288, %v1280
      %1298 = vst.msk [vmem:[%s483 + $0x48] sm:$0xff] %vm1288, %v1281
      %1299 = vst.msk [vmem:[%s483 + $0x50] sm:$0xff] %vm1288, %v1282
      %1300 = vst.msk [vmem:[%s483 + $0x58] sm:$0xff] %vm1288, %v1283
      %1301 = vst.msk [vmem:[%s483 + $0x60] sm:$0xff] %vm1288, %v1284
      %1302 = vst.msk [vmem:[%s483 + $0x68] sm:$0xff] %vm1288, %v1285
      %1303 = vst.msk [vmem:[%s483 + $0x70] sm:$0xff] %vm1288, %v1286
      %1304 = vst.msk [vmem:[%s483 + $0x78] sm:$0xff] %vm1288, %v1287
      %s1305 = smul.u32 16, %s25
      %p1306 = scmp.lt.s32.totalorder %s1305, 31
      %s1307 = scalar_select %p1306, %s1305, 31
      %s1308 = smul.addr %s1307, 8
      %s1309 = scalar_lea.vmem %s12, %s1308
      // Predicated region
      $region69: #{tpu_custom_call.1} parent=67 // pred_check
        %p1310 = pneg %p315
      $region70: #{tpu_custom_call.1} parent=67 // pred_check_branch
        %1312 = sbr.rel (%p1310) target = $region72
      $region71: #{tpu_custom_call.1} parent=67 // pred_region
        %s1313 = smul.u32 16, %s25
      $region72: #{tpu_custom_call.1} parent=67 // pred_fallthru
        _
    $region68: #{tpu_custom_call.1} parent=5 // pred_fallthru
      _
    %p1314 = scmp.le.s32.totalorder 2, %s20
    // Predicated region
    $region73: #{tpu_custom_call.1} parent=5 // pred_check
      %p1315 = pneg %p1314
    $region74: #{tpu_custom_call.1} parent=5 // pred_check_branch
      %1317 = sbr.rel (%p1315) target = $region76
    $region75: #{tpu_custom_call.1} parent=5 // pred_region
      %s1318 = ssub.s32 %s20, 2
      // Predicated region
      $region77: #{tpu_custom_call.1} parent=75 // pred_check
        %p1319 = pneg %p321
      $region78: #{tpu_custom_call.1} parent=75 // pred_check_branch
        %1321 = sbr.rel (%p1319) target = $region80
      $region79: #{tpu_custom_call.1} parent=75 // pred_region
        %s1322 = smul.u32 16, %s26
        %p1323 = scmp.lt.s32.totalorder %s1322, 31
        %s1324 = scalar_select %p1323, %s1322, 31
        %s1325 = smul.addr %s1324, 8
        %s1326 = scalar_lea.vmem %s12, %s1325
      $region80: #{tpu_custom_call.1} parent=75 // pred_fallthru
        _
    $region76: #{tpu_custom_call.1} parent=5 // pred_fallthru
      _
  $region6: #{tpu_custom_call.1} parent=0 // loop_footer
    %s24 = sadd.s32 1, %s20
  $region7: #{tpu_custom_call.1} parent=0 // loop_footer_branch
    %19 = sbr.rel target = $region3
  $region8: #{tpu_custom_call.1} parent=0 // loop_exit
    _

</llo_original>
